<compile_context>
chip_gen: v5e
topology: v5e:2x2
jax: 0.10.0
libtpu: 0.0.40
codegen_flags: <defaults>
</compile_context>

<pallas_src>
import jax
import jax.numpy as jnp
from jax.experimental import pallas as pl
from jax.experimental.pallas import tpu as pltpu

# MyNet dims: Linear(2->10) -> ReLU -> Linear(10->5) -> ReLU -> Linear(5->1) -> Sigmoid
D_IN, D_H1, D_H2, D_OUT = 2, 10, 5, 1

# Row offsets inside the packed parameter slab. Each layer's section starts on an
# 8-row (sublane-tile) boundary; lanes are zero-padded to 128.
_W1_ROW, _B1_ROW = 0, 2      # w1: rows 0..1,   b1: row 2
_W2_ROW, _B2_ROW = 8, 18     # w2: rows 8..17,  b2: row 18
_W3_ROW, _B3_ROW = 24, 29    # w3: rows 24..28, b3: row 29
PARAM_ROWS, PARAM_LANES = 32, 128   # (32, 128) f32 = 16 KiB -> a single DMA


def pack_params(params):
    """Pack (w1,b1,w2,b2,w3,b3) into one zero-padded (32, 128) f32 slab."""
    w1, b1, w2, b2, w3, b3 = params
    slab = jnp.zeros((PARAM_ROWS, PARAM_LANES), jnp.float32)
    slab = slab.at[_W1_ROW:_W1_ROW + D_IN, :D_H1].set(w1)
    slab = slab.at[_B1_ROW, :D_H1].set(b1.reshape(D_H1))
    slab = slab.at[_W2_ROW:_W2_ROW + D_H1, :D_H2].set(w2)
    slab = slab.at[_B2_ROW, :D_H2].set(b2.reshape(D_H2))
    slab = slab.at[_W3_ROW:_W3_ROW + D_H2, :D_OUT].set(w3)
    slab = slab.at[_B3_ROW, :D_OUT].set(b3.reshape(D_OUT))
    return slab


def _dense_vpu(h, p_ref, w_row, b_row, n, relu):
    """y = h @ W + b as an unrolled VPU broadcast-MAC (K in {2,10,5} stays off the MXU).

    h: (B, K) activations; W rows live at p_ref[w_row + k, :n]; bias at p_ref[b_row, :n].
    The bias initializes the accumulator (fused into the first MAC term).
    """
    k_dim = h.shape[1]
    acc = h[:, 0:1] * p_ref[w_row:w_row + 1, 0:n] + p_ref[b_row:b_row + 1, 0:n]
    for k in range(1, k_dim):                       # static Python unroll (K <= 10)
        acc = acc + h[:, k:k + 1] * p_ref[w_row + k:w_row + k + 1, 0:n]
    if relu:
        acc = jnp.maximum(acc, 0.0)
    return acc


def mlp_kernel(x_ref, p_ref, o_ref):
    # Two inputs total (activations + packed params) -> 2 DMAs instead of 7.
    x = x_ref[...]                                              # (B, 2), already f32
    h1 = _dense_vpu(x,  p_ref, _W1_ROW, _B1_ROW, D_H1, relu=True)    # (B, 10)
    h2 = _dense_vpu(h1, p_ref, _W2_ROW, _B2_ROW, D_H2, relu=True)    # (B, 5)
    h3 = _dense_vpu(h2, p_ref, _W3_ROW, _B3_ROW, D_OUT, relu=False)  # (B, 1)
    # Sigmoid epilogue: exp goes to the EUP slot; matches torch.nn.Sigmoid.
    o_ref[...] = jax.nn.sigmoid(h3)


@jax.jit
def mynet_forward(x, packed_params):
    B = x.shape[0]
    return pl.pallas_call(
        mlp_kernel,
        out_shape=jax.ShapeDtypeStruct((B, D_OUT), jnp.float32),
        # Tiny (~1.2 kFLOP at B=8): everything fits in VMEM, single block, no grid.
        # TODO(synk): if B grows to hundreds+, grid over batch
        #   (x BlockSpec((bm, D_IN), lambda i: (i, 0)); params lambda i: (0, 0)),
        #   pad the output to a lane-dense 128-wide slab (slice outside), and mark
        #   the batch axis "parallel" so v7x can split it across its 2 TensorCores.
        in_specs=[pl.BlockSpec(memory_space=pltpu.VMEM),
                  pl.BlockSpec(memory_space=pltpu.VMEM)],
        out_specs=pl.BlockSpec(memory_space=pltpu.VMEM),
    )(x, packed_params)


def init_params(key):
    """Deterministic init mimicking nn.Linear default (uniform +/- 1/sqrt(fan_in)).
    Weights stored as (in_features, out_features); biases as (1, out_features)."""
    dims = [(D_IN, D_H1), (D_H1, D_H2), (D_H2, D_OUT)]
    params = []
    for (fan_in, fan_out) in dims:
        key, kw, kb = jax.random.split(key, 3)
        bound = 1.0 / jnp.sqrt(float(fan_in))
        w = jax.random.uniform(kw, (fan_in, fan_out), jnp.float32, -bound, bound)
        b = jax.random.uniform(kb, (1, fan_out), jnp.float32, -bound, bound)
        params += [w, b]
    return tuple(params)


if __name__ == "__main__":
    key = jax.random.PRNGKey(0)
    key, kx = jax.random.split(key)
    x = jax.random.normal(kx, (8, D_IN), jnp.float32)   # batch=8, in_features=2

    params = init_params(key)
    packed = pack_params(params)

    out = mynet_forward(x, packed)
    jax.block_until_ready(out)

    # Reference check in plain JAX (same math as torch MyNet.forward).
    w1, b1, w2, b2, w3, b3 = params
    h = jnp.maximum(x @ w1 + b1, 0.0)
    h = jnp.maximum(h @ w2 + b2, 0.0)
    ref = jax.nn.sigmoid(h @ w3 + b3)
    assert out.shape == (8, 1)
    assert jnp.allclose(out, ref, atol=1e-5, rtol=1e-5)

    print("KERNEL_OK")
</pallas_src>

<mosaic_0001>
module attributes {stable_mosaic.version = 11 : i64} {
  func.func @mlp_kernel(%arg0: memref<8x2xf32, #tpu.memory_space<vmem>>, %arg1: memref<32x128xf32, #tpu.memory_space<vmem>>, %arg2: memref<8x1xf32, #tpu.memory_space<vmem>>) attributes {dimension_semantics = [], scalar_prefetch = 0 : i64, scratch_operands = 0 : i64, tpu.core_type = #tpu.core_type<tc>} {
    %c0 = arith.constant 0 : index
    %c0_0 = arith.constant 0 : index
    %0 = vector.load %arg0[%c0, %c0_0] : memref<8x2xf32, #tpu.memory_space<vmem>>, vector<8x2xf32>
    %1 = vector.extract_strided_slice %0 {offsets = [0, 0], sizes = [8, 1], strides = [1, 1]} : vector<8x2xf32> to vector<8x1xf32>
    %c0_1 = arith.constant 0 : index
    %c0_2 = arith.constant 0 : index
    %2 = vector.load %arg1[%c0_1, %c0_2] : memref<32x128xf32, #tpu.memory_space<vmem>>, vector<1x10xf32>
    %3 = vector.broadcast %1 : vector<8x1xf32> to vector<8x10xf32>
    %4 = vector.broadcast %2 : vector<1x10xf32> to vector<8x10xf32>
    %5 = arith.mulf %3, %4 : vector<8x10xf32>
    %c2 = arith.constant 2 : index
    %c0_3 = arith.constant 0 : index
    %6 = vector.load %arg1[%c2, %c0_3] : memref<32x128xf32, #tpu.memory_space<vmem>>, vector<1x10xf32>
    %7 = vector.broadcast %6 : vector<1x10xf32> to vector<8x10xf32>
    %8 = arith.addf %5, %7 : vector<8x10xf32>
    %9 = vector.extract_strided_slice %0 {offsets = [0, 1], sizes = [8, 1], strides = [1, 1]} : vector<8x2xf32> to vector<8x1xf32>
    %c1 = arith.constant 1 : index
    %c0_4 = arith.constant 0 : index
    %10 = vector.load %arg1[%c1, %c0_4] : memref<32x128xf32, #tpu.memory_space<vmem>>, vector<1x10xf32>
    %11 = vector.broadcast %9 : vector<8x1xf32> to vector<8x10xf32>
    %12 = vector.broadcast %10 : vector<1x10xf32> to vector<8x10xf32>
    %13 = arith.mulf %11, %12 : vector<8x10xf32>
    %14 = arith.addf %8, %13 : vector<8x10xf32>
    %cst = arith.constant 0.000000e+00 : f32
    %15 = vector.broadcast %cst : f32 to vector<8x10xf32>
    %16 = arith.maximumf %14, %15 : vector<8x10xf32>
    %17 = vector.extract_strided_slice %16 {offsets = [0, 0], sizes = [8, 1], strides = [1, 1]} : vector<8x10xf32> to vector<8x1xf32>
    %c8 = arith.constant 8 : index
    %c0_5 = arith.constant 0 : index
    %18 = vector.load %arg1[%c8, %c0_5] : memref<32x128xf32, #tpu.memory_space<vmem>>, vector<1x5xf32>
    %19 = vector.broadcast %17 : vector<8x1xf32> to vector<8x5xf32>
    %20 = vector.broadcast %18 : vector<1x5xf32> to vector<8x5xf32>
    %21 = arith.mulf %19, %20 : vector<8x5xf32>
    %c18 = arith.constant 18 : index
    %c0_6 = arith.constant 0 : index
    %22 = vector.load %arg1[%c18, %c0_6] : memref<32x128xf32, #tpu.memory_space<vmem>>, vector<1x5xf32>
    %23 = vector.broadcast %22 : vector<1x5xf32> to vector<8x5xf32>
    %24 = arith.addf %21, %23 : vector<8x5xf32>
    %25 = vector.extract_strided_slice %16 {offsets = [0, 1], sizes = [8, 1], strides = [1, 1]} : vector<8x10xf32> to vector<8x1xf32>
    %c9 = arith.constant 9 : index
    %c0_7 = arith.constant 0 : index
    %26 = vector.load %arg1[%c9, %c0_7] : memref<32x128xf32, #tpu.memory_space<vmem>>, vector<1x5xf32>
    %27 = vector.broadcast %25 : vector<8x1xf32> to vector<8x5xf32>
    %28 = vector.broadcast %26 : vector<1x5xf32> to vector<8x5xf32>
    %29 = arith.mulf %27, %28 : vector<8x5xf32>
    %30 = arith.addf %24, %29 : vector<8x5xf32>
    %31 = vector.extract_strided_slice %16 {offsets = [0, 2], sizes = [8, 1], strides = [1, 1]} : vector<8x10xf32> to vector<8x1xf32>
    %c10 = arith.constant 10 : index
    %c0_8 = arith.constant 0 : index
    %32 = vector.load %arg1[%c10, %c0_8] : memref<32x128xf32, #tpu.memory_space<vmem>>, vector<1x5xf32>
    %33 = vector.broadcast %31 : vector<8x1xf32> to vector<8x5xf32>
    %34 = vector.broadcast %32 : vector<1x5xf32> to vector<8x5xf32>
    %35 = arith.mulf %33, %34 : vector<8x5xf32>
    %36 = arith.addf %30, %35 : vector<8x5xf32>
    %37 = vector.extract_strided_slice %16 {offsets = [0, 3], sizes = [8, 1], strides = [1, 1]} : vector<8x10xf32> to vector<8x1xf32>
    %c11 = arith.constant 11 : index
    %c0_9 = arith.constant 0 : index
    %38 = vector.load %arg1[%c11, %c0_9] : memref<32x128xf32, #tpu.memory_space<vmem>>, vector<1x5xf32>
    %39 = vector.broadcast %37 : vector<8x1xf32> to vector<8x5xf32>
    %40 = vector.broadcast %38 : vector<1x5xf32> to vector<8x5xf32>
    %41 = arith.mulf %39, %40 : vector<8x5xf32>
    %42 = arith.addf %36, %41 : vector<8x5xf32>
    %43 = vector.extract_strided_slice %16 {offsets = [0, 4], sizes = [8, 1], strides = [1, 1]} : vector<8x10xf32> to vector<8x1xf32>
    %c12 = arith.constant 12 : index
    %c0_10 = arith.constant 0 : index
    %44 = vector.load %arg1[%c12, %c0_10] : memref<32x128xf32, #tpu.memory_space<vmem>>, vector<1x5xf32>
    %45 = vector.broadcast %43 : vector<8x1xf32> to vector<8x5xf32>
    %46 = vector.broadcast %44 : vector<1x5xf32> to vector<8x5xf32>
    %47 = arith.mulf %45, %46 : vector<8x5xf32>
    %48 = arith.addf %42, %47 : vector<8x5xf32>
    %49 = vector.extract_strided_slice %16 {offsets = [0, 5], sizes = [8, 1], strides = [1, 1]} : vector<8x10xf32> to vector<8x1xf32>
    %c13 = arith.constant 13 : index
    %c0_11 = arith.constant 0 : index
    %50 = vector.load %arg1[%c13, %c0_11] : memref<32x128xf32, #tpu.memory_space<vmem>>, vector<1x5xf32>
    %51 = vector.broadcast %49 : vector<8x1xf32> to vector<8x5xf32>
    %52 = vector.broadcast %50 : vector<1x5xf32> to vector<8x5xf32>
    %53 = arith.mulf %51, %52 : vector<8x5xf32>
    %54 = arith.addf %48, %53 : vector<8x5xf32>
    %55 = vector.extract_strided_slice %16 {offsets = [0, 6], sizes = [8, 1], strides = [1, 1]} : vector<8x10xf32> to vector<8x1xf32>
    %c14 = arith.constant 14 : index
    %c0_12 = arith.constant 0 : index
    %56 = vector.load %arg1[%c14, %c0_12] : memref<32x128xf32, #tpu.memory_space<vmem>>, vector<1x5xf32>
    %57 = vector.broadcast %55 : vector<8x1xf32> to vector<8x5xf32>
    %58 = vector.broadcast %56 : vector<1x5xf32> to vector<8x5xf32>
    %59 = arith.mulf %57, %58 : vector<8x5xf32>
    %60 = arith.addf %54, %59 : vector<8x5xf32>
    %61 = vector.extract_strided_slice %16 {offsets = [0, 7], sizes = [8, 1], strides = [1, 1]} : vector<8x10xf32> to vector<8x1xf32>
    %c15 = arith.constant 15 : index
    %c0_13 = arith.constant 0 : index
    %62 = vector.load %arg1[%c15, %c0_13] : memref<32x128xf32, #tpu.memory_space<vmem>>, vector<1x5xf32>
    %63 = vector.broadcast %61 : vector<8x1xf32> to vector<8x5xf32>
    %64 = vector.broadcast %62 : vector<1x5xf32> to vector<8x5xf32>
    %65 = arith.mulf %63, %64 : vector<8x5xf32>
    %66 = arith.addf %60, %65 : vector<8x5xf32>
    %67 = vector.extract_strided_slice %16 {offsets = [0, 8], sizes = [8, 1], strides = [1, 1]} : vector<8x10xf32> to vector<8x1xf32>
    %c16 = arith.constant 16 : index
    %c0_14 = arith.constant 0 : index
    %68 = vector.load %arg1[%c16, %c0_14] : memref<32x128xf32, #tpu.memory_space<vmem>>, vector<1x5xf32>
    %69 = vector.broadcast %67 : vector<8x1xf32> to vector<8x5xf32>
    %70 = vector.broadcast %68 : vector<1x5xf32> to vector<8x5xf32>
    %71 = arith.mulf %69, %70 : vector<8x5xf32>
    %72 = arith.addf %66, %71 : vector<8x5xf32>
    %73 = vector.extract_strided_slice %16 {offsets = [0, 9], sizes = [8, 1], strides = [1, 1]} : vector<8x10xf32> to vector<8x1xf32>
    %c17 = arith.constant 17 : index
    %c0_15 = arith.constant 0 : index
    %74 = vector.load %arg1[%c17, %c0_15] : memref<32x128xf32, #tpu.memory_space<vmem>>, vector<1x5xf32>
    %75 = vector.broadcast %73 : vector<8x1xf32> to vector<8x5xf32>
    %76 = vector.broadcast %74 : vector<1x5xf32> to vector<8x5xf32>
    %77 = arith.mulf %75, %76 : vector<8x5xf32>
    %78 = arith.addf %72, %77 : vector<8x5xf32>
    %cst_16 = arith.constant 0.000000e+00 : f32
    %79 = vector.broadcast %cst_16 : f32 to vector<8x5xf32>
    %80 = arith.maximumf %78, %79 : vector<8x5xf32>
    %81 = vector.extract_strided_slice %80 {offsets = [0, 0], sizes = [8, 1], strides = [1, 1]} : vector<8x5xf32> to vector<8x1xf32>
    %c24 = arith.constant 24 : index
    %c0_17 = arith.constant 0 : index
    %82 = vector.load %arg1[%c24, %c0_17] : memref<32x128xf32, #tpu.memory_space<vmem>>, vector<1x1xf32>
    %83 = vector.broadcast %82 : vector<1x1xf32> to vector<8x1xf32>
    %84 = arith.mulf %81, %83 : vector<8x1xf32>
    %c29 = arith.constant 29 : index
    %c0_18 = arith.constant 0 : index
    %85 = vector.load %arg1[%c29, %c0_18] : memref<32x128xf32, #tpu.memory_space<vmem>>, vector<1x1xf32>
    %86 = vector.broadcast %85 : vector<1x1xf32> to vector<8x1xf32>
    %87 = arith.addf %84, %86 : vector<8x1xf32>
    %88 = vector.extract_strided_slice %80 {offsets = [0, 1], sizes = [8, 1], strides = [1, 1]} : vector<8x5xf32> to vector<8x1xf32>
    %c25 = arith.constant 25 : index
    %c0_19 = arith.constant 0 : index
    %89 = vector.load %arg1[%c25, %c0_19] : memref<32x128xf32, #tpu.memory_space<vmem>>, vector<1x1xf32>
    %90 = vector.broadcast %89 : vector<1x1xf32> to vector<8x1xf32>
    %91 = arith.mulf %88, %90 : vector<8x1xf32>
    %92 = arith.addf %87, %91 : vector<8x1xf32>
    %93 = vector.extract_strided_slice %80 {offsets = [0, 2], sizes = [8, 1], strides = [1, 1]} : vector<8x5xf32> to vector<8x1xf32>
    %c26 = arith.constant 26 : index
    %c0_20 = arith.constant 0 : index
    %94 = vector.load %arg1[%c26, %c0_20] : memref<32x128xf32, #tpu.memory_space<vmem>>, vector<1x1xf32>
    %95 = vector.broadcast %94 : vector<1x1xf32> to vector<8x1xf32>
    %96 = arith.mulf %93, %95 : vector<8x1xf32>
    %97 = arith.addf %92, %96 : vector<8x1xf32>
    %98 = vector.extract_strided_slice %80 {offsets = [0, 3], sizes = [8, 1], strides = [1, 1]} : vector<8x5xf32> to vector<8x1xf32>
    %c27 = arith.constant 27 : index
    %c0_21 = arith.constant 0 : index
    %99 = vector.load %arg1[%c27, %c0_21] : memref<32x128xf32, #tpu.memory_space<vmem>>, vector<1x1xf32>
    %100 = vector.broadcast %99 : vector<1x1xf32> to vector<8x1xf32>
    %101 = arith.mulf %98, %100 : vector<8x1xf32>
    %102 = arith.addf %97, %101 : vector<8x1xf32>
    %103 = vector.extract_strided_slice %80 {offsets = [0, 4], sizes = [8, 1], strides = [1, 1]} : vector<8x5xf32> to vector<8x1xf32>
    %c28 = arith.constant 28 : index
    %c0_22 = arith.constant 0 : index
    %104 = vector.load %arg1[%c28, %c0_22] : memref<32x128xf32, #tpu.memory_space<vmem>>, vector<1x1xf32>
    %105 = vector.broadcast %104 : vector<1x1xf32> to vector<8x1xf32>
    %106 = arith.mulf %103, %105 : vector<8x1xf32>
    %107 = arith.addf %102, %106 : vector<8x1xf32>
    %108 = arith.negf %107 : vector<8x1xf32>
    %109 = math.exp %108 : vector<8x1xf32>
    %cst_23 = arith.constant 1.000000e+00 : f32
    %110 = vector.broadcast %cst_23 : f32 to vector<8x1xf32>
    %111 = arith.addf %110, %109 : vector<8x1xf32>
    %112 = arith.divf %110, %111 : vector<8x1xf32>
    %c0_24 = arith.constant 0 : index
    %c0_25 = arith.constant 0 : index
    %113 = vector.load %arg2[%c0_24, %c0_25] : memref<8x1xf32, #tpu.memory_space<vmem>>, vector<8x1xf32>
    tpu.vector_store %arg2[%c0_24, %c0_25], %112 {strides = array<i32>} : memref<8x1xf32, #tpu.memory_space<vmem>>, vector<8x1xf32>,
    return
  }
}

</mosaic_0001>

<llo_original>
// kernel: mynet_forward.1
$region0: #{mynet_forward.1}
  #allocation0 [shape = 'u32[]', space=smem, size = 0x4, offset = 0x4, fixed_abs, tag = 'smem constant byte address 0x4 - core index']
  #allocation1 [shape = 'u32[72,128]{1,0:T(1,128)}', space=vmem, size = 0x9000, scoped, tag = 'internal scratch']
  %s0 = inlined_call_operand.vmem [shape: f32[8,2], index: 0, kind: input, shape index: {}]
  %s1 = inlined_call_operand.hbm [shape: f32[32,128], index: 1, kind: input, shape index: {}]
  %s2 = inlined_call_operand.vmem [shape: f32[8,1], index: 2, kind: output, shape index: {}]
  %s3 = sld [smem:[#allocation0]]
  $region22: #{mynet_forward.1} parent=0
    _
  %s5 = ssub.s32 1, %s3
  %s6 = scalar_select 0, %s5, %s3
  $region1: #{mynet_forward.1} parent=0
    #allocation2 [shape = 'u8[16384]{0}', space=vmem, size = 0x4000, scoped, tag = 'input window, operand 1, single buffered']
    #allocation3 [shape = 's32[1]{0}', space=sflag, size = 0x4, scoped, tag = 'scoped memory for mynet_forward.1']
    %7 = vsyncpa [#allocation3], 0
    // Predicated region
    $region2: #{mynet_forward.1} parent=1 // pred_check
      _
    $region3: #{mynet_forward.1} parent=1 // pred_check_branch
      %9 = sbr.rel (0) target = $region5
    $region4: #{mynet_forward.1} parent=1 // pred_region
      _
    $region5: #{mynet_forward.1} parent=1 // pred_fallthru
      _
    // Predicated region
    $region6: #{mynet_forward.1} parent=1 // pred_check
      _
    $region7: #{mynet_forward.1} parent=1 // pred_check_branch
      %11 = sbr.rel (0) target = $region9
    $region8: #{mynet_forward.1} parent=1 // pred_region
      %13 = vsyncadd [#allocation3], 0
      %s14 = sshll.u32 %s1, 4
      %s15 = int_to_ptr.hbm [resolvable:$true] %s14
      %s16 = sshll.u32 [#allocation2], 4
      %s17 = int_to_ptr.vmem [resolvable:$true] %s16
      %22 = dma.hbm_to_vmem [thread:$0]  %s15, 512, %s17, [#allocation3], 128, 128, 8
    $region9: #{mynet_forward.1} parent=1 // pred_fallthru
      _
    // Predicated region
    $region10: #{mynet_forward.1} parent=1 // pred_check
      _
    $region11: #{mynet_forward.1} parent=1 // pred_check_branch
      %24 = sbr.rel (0) target = $region13
    $region12: #{mynet_forward.1} parent=1 // pred_region
      %26 = dma.done [#allocation3], 512
    $region13: #{mynet_forward.1} parent=1 // pred_fallthru
      _
    %v27 = vld [vmem:[%s0] sm:$0xff]
    %v28 = vld [vmem:[#allocation2] sm:$0x1]
    %30 = vset.pattern.permute.xlu0 0
    %31 = vperm.xlu0 %30, %v27
    %v32 = vpop.permute.xlu0 %31
    %v34 = vperm.slane %v28, 0
    %v35 = vmul.f32 %v32, %v34
    %v36 = vld [vmem:[#allocation2 + $0x2] sm:$0x1]
    %v37 = vperm.slane %v36, 0
    %v38 = vadd.f32 %v35, %v37
    %v39 = vld [vmem:[#allocation2 + $0x1] sm:$0x1]
    %40 = vset.pattern.permute.xlu0 1
    %41 = vperm.xlu0 %40, %v27
    %v42 = vpop.permute.xlu0 %41
    %v44 = vperm.slane %v39, 0
    %v45 = vmul.f32 %v42, %v44
    %v46 = vadd.f32 %v38, %v45
    %v47 = vmax.f32 %v46, 0.0
    %v48 = vld [vmem:[#allocation2 + $0x8] sm:$0x1]
    %50 = vset.pattern.permute.xlu0 0
    %51 = vperm.xlu0 %50, %v47
    %v52 = vpop.permute.xlu0 %51
    %v54 = vperm.slane %v48, 0
    %v55 = vmul.f32 %v52, %v54
    %v56 = vld [vmem:[#allocation2 + $0x12] sm:$0x1]
    %v57 = vperm.slane %v56, 0
    %v58 = vadd.f32 %v55, %v57
    %v59 = vld [vmem:[#allocation2 + $0x9] sm:$0x1]
    %60 = vset.pattern.permute.xlu0 1
    %61 = vperm.xlu0 %60, %v47
    %v62 = vpop.permute.xlu0 %61
    %v64 = vperm.slane %v59, 0
    %v65 = vmul.f32 %v62, %v64
    %v66 = vadd.f32 %v58, %v65
    %v67 = vld [vmem:[#allocation2 + $0xa] sm:$0x1]
    %68 = vset.pattern.permute.xlu0 2
    %69 = vperm.xlu0 %68, %v47
    %v70 = vpop.permute.xlu0 %69
    %v72 = vperm.slane %v67, 0
    %v73 = vmul.f32 %v70, %v72
    %v74 = vadd.f32 %v66, %v73
    %v75 = vld [vmem:[#allocation2 + $0xb] sm:$0x1]
    %76 = vset.pattern.permute.xlu0 3
    %77 = vperm.xlu0 %76, %v47
    %v78 = vpop.permute.xlu0 %77
    %v80 = vperm.slane %v75, 0
    %v81 = vmul.f32 %v78, %v80
    %v82 = vadd.f32 %v74, %v81
    %v83 = vld [vmem:[#allocation2 + $0xc] sm:$0x1]
    %84 = vset.pattern.permute.xlu0 4
    %85 = vperm.xlu0 %84, %v47
    %v86 = vpop.permute.xlu0 %85
    %v88 = vperm.slane %v83, 0
    %v89 = vmul.f32 %v86, %v88
    %v90 = vadd.f32 %v82, %v89
    %v91 = vld [vmem:[#allocation2 + $0xd] sm:$0x1]
    %92 = vset.pattern.permute.xlu0 5
    %93 = vperm.xlu0 %92, %v47
    %v94 = vpop.permute.xlu0 %93
    %v96 = vperm.slane %v91, 0
    %v97 = vmul.f32 %v94, %v96
    %v98 = vadd.f32 %v90, %v97
    %v99 = vld [vmem:[#allocation2 + $0xe] sm:$0x1]
    %100 = vset.pattern.permute.xlu0 6
    %101 = vperm.xlu0 %100, %v47
    %v102 = vpop.permute.xlu0 %101
    %v104 = vperm.slane %v99, 0
    %v105 = vmul.f32 %v102, %v104
    %v106 = vadd.f32 %v98, %v105
    %v107 = vld [vmem:[#allocation2 + $0xf] sm:$0x1]
    %108 = vset.pattern.permute.xlu0 7
    %109 = vperm.xlu0 %108, %v47
    %v110 = vpop.permute.xlu0 %109
    %v112 = vperm.slane %v107, 0
    %v113 = vmul.f32 %v110, %v112
    %v114 = vadd.f32 %v106, %v113
    %v115 = vld [vmem:[#allocation2 + $0x10] sm:$0x1]
    %116 = vset.pattern.permute.xlu0 8
    %117 = vperm.xlu0 %116, %v47
    %v118 = vpop.permute.xlu0 %117
    %v120 = vperm.slane %v115, 0
    %v121 = vmul.f32 %v118, %v120
    %v122 = vadd.f32 %v114, %v121
    %v123 = vld [vmem:[#allocation2 + $0x11] sm:$0x1]
    %124 = vset.pattern.permute.xlu0 9
    %125 = vperm.xlu0 %124, %v47
    %v126 = vpop.permute.xlu0 %125
    %v128 = vperm.slane %v123, 0
    %v129 = vmul.f32 %v126, %v128
    %v130 = vadd.f32 %v122, %v129
    %v131 = vmax.f32 %v130, 0.0
    %v132 = vld [vmem:[#allocation2 + $0x18] sm:$0x1]
    %v133 = vperm.slane %v132, 0
    %v134 = vmul.f32 %v131, %v133
    %v135 = vld [vmem:[#allocation2 + $0x1d] sm:$0x1]
    %v136 = vperm.slane %v135, 0
    %v137 = vadd.f32 %v134, %v136
    %v138 = vld [vmem:[#allocation2 + $0x19] sm:$0x1]
    %v139 = vperm.slane %v138, 0
    %141 = vrot.lane.b32.xlu0 %v139, 1
    %v142 = vpop.permute.xlu0 %141
    %v144 = vmul.f32 %v131, %v142
    %146 = vrot.lane.b32.xlu0 %v144, 127
    %v147 = vpop.permute.xlu0 %146
    %v149 = vadd.f32 %v137, %v147
    %v150 = vld [vmem:[#allocation2 + $0x1a] sm:$0x1]
    %v151 = vperm.slane %v150, 0
    %153 = vrot.lane.b32.xlu0 %v151, 2
    %v154 = vpop.permute.xlu0 %153
    %v156 = vmul.f32 %v131, %v154
    %158 = vrot.lane.b32.xlu0 %v156, 126
    %v159 = vpop.permute.xlu0 %158
    %v161 = vadd.f32 %v149, %v159
    %v162 = vld [vmem:[#allocation2 + $0x1b] sm:$0x1]
    %v163 = vperm.slane %v162, 0
    %165 = vrot.lane.b32.xlu0 %v163, 3
    %v166 = vpop.permute.xlu0 %165
    %v168 = vmul.f32 %v131, %v166
    %170 = vrot.lane.b32.xlu0 %v168, 125
    %v171 = vpop.permute.xlu0 %170
    %v173 = vadd.f32 %v161, %v171
    %v174 = vld [vmem:[#allocation2 + $0x1c] sm:$0x1]
    %v175 = vperm.slane %v174, 0
    %177 = vrot.lane.b32.xlu0 %v175, 4
    %v178 = vpop.permute.xlu0 %177
    %v180 = vmul.f32 %v131, %v178
    %182 = vrot.lane.b32.xlu0 %v180, 124
    %v183 = vpop.permute.xlu0 %182
    %v185 = vadd.f32 %v173, %v183
    %v186 = vxor.u32 %v185, 2147483648
    %v187 = vmul.f32 %v186, 1.442695
    %v188 = vpow.pop %v187
    %v189 = vadd.f32 %v188, 1.0
    %v190 = vrcp.pop %v189
    %v191 = vmul.f32 %v189, %v190
    %v192 = vsub.f32 1.0, %v191
    %v193 = vmul.f32 %v190, %v192
    %v194 = vadd.f32 %v190, %v193
    %vm195 = vweird.f32 %v189
    %vm196 = vweird.f32 %v190
    %vm197 = vmor %vm195, %vm196
    %v198 = vsel %vm197, %v190, %v194
    %v199 = vand.u32 2147483647, %v189
    %vm200 = vcmp.eq.f32.partialorder %v199, 8.507059e+37
    %v201 = vand.u32 %v189, 2147483648
    %v202 = vor.u32 1.1754944e-38, %v201
    %v203 = vsel %vm200, %v202, %v198
    %v204 = vmul.f32 1.0, %v203
    %vm205 = vcmask 7168
    %206 = vst.msk [vmem:[%s2] sm:$0xff] %vm205, %v204
    // Predicated region
    $region14: #{mynet_forward.1} parent=1 // pred_check
      _
    $region15: #{mynet_forward.1} parent=1 // pred_check_branch
      %208 = sbr.rel (0) target = $region17
    $region16: #{mynet_forward.1} parent=1 // pred_region
      _
    $region17: #{mynet_forward.1} parent=1 // pred_fallthru
      _
    // Predicated region
    $region18: #{mynet_forward.1} parent=1 // pred_check
      _
    $region19: #{mynet_forward.1} parent=1 // pred_check_branch
      %210 = sbr.rel (0) target = $region21
    $region20: #{mynet_forward.1} parent=1 // pred_region
      _
    $region21: #{mynet_forward.1} parent=1 // pred_fallthru
      _
    %211 = vsyncpa [#allocation3], 1

</llo_original>
